<compile_context>
chip_gen: v5e
topology: v5e:2x2
jax: 0.10.0
libtpu: 0.0.40
codegen_flags: <defaults>
</compile_context>

<pallas_src>
import functools

import jax
import jax.numpy as jnp
import numpy as np
from jax.experimental import pallas as pl
from jax.experimental.pallas import tpu as pltpu


def _mha_map_kernel(q_ref,      # (1, TQ, Dq)   query tile for image b
                    k_ref,      # (1, Dq, HW)   raw feature map for image b
                    wq_ref,     # (Dq, hidden)  q_linear.weight.T
                    bq_ref,     # (1, hidden)   q_linear.bias
                    wk_ref,     # (hidden, Dq)  k_linear.weight
                    bk_ref,     # (hidden, 1)   k_linear.bias
                    madd_ref,   # (1, 1, HW)    additive mask (0 or -inf)
                    out_ref,    # (1, TQ, N*HW) attention weights
                    kproj_ref,  # VMEM scratch (hidden, HW), persists across qt
                    *, num_heads, head_dim, norm):
    # ---- k projection (1x1 conv == matmul), hoisted to the first q-tile of b.
    @pl.when(pl.program_id(1) == 0)
    def _():
        kproj_ref[...] = (
            jnp.dot(wk_ref[...], k_ref[0], preferred_element_type=jnp.float32)
            + bk_ref[...])

    # ---- q projection (MXU) + DETR normalization factor.
    qp = (jnp.dot(q_ref[0], wq_ref[...], preferred_element_type=jnp.float32)
          + bq_ref[...]) * norm                                   # (TQ, hidden)

    madd = madd_ref[0]                                            # (1, HW)

    # ---- per-head logits, concatenated lane-dense into (TQ, N*HW).
    heads = []
    for n in range(num_heads):
        qh = qp[:, n * head_dim:(n + 1) * head_dim]               # (TQ, C)
        kh = kproj_ref[n * head_dim:(n + 1) * head_dim, :]        # (C, HW)
        heads.append(
            jnp.dot(qh, kh, preferred_element_type=jnp.float32) + madd)
    logits = jnp.concatenate(heads, axis=-1)                      # (TQ, N*HW)

    # ---- softmax over the flattened (heads, H, W) axis (torch flatten(2)).
    m = jnp.max(logits, axis=-1, keepdims=True)
    e = jnp.exp(logits - m)
    s = jnp.sum(e, axis=-1, keepdims=True)
    out_ref[0] = (e * pl.reciprocal(s)).astype(out_ref.dtype)


def mh_attention_map(q, k, q_weight, q_bias, k_weight, k_bias, num_heads,
                     mask=None):
    """JAX/Pallas equivalent of MHAttentionMap.forward (dropout = identity)."""
    B, Q, Dq = q.shape
    Bk, Dk, H, W = k.shape
    hidden = q_weight.shape[0]
    assert Bk == B and Dk == Dq and hidden % num_heads == 0
    C = hidden // num_heads
    HW = H * W
    NHW = num_heads * HW
    norm = float(hidden / num_heads) ** (-0.5)

    # Pad query axis to a sublane-friendly tile size.
    QP = max(8, -(-Q // 8) * 8)
    TQ = QP if QP <= 128 else 128
    QP = -(-QP // TQ) * TQ

    qf = jnp.zeros((B, QP, Dq), jnp.float32).at[:, :Q, :].set(
        q.astype(jnp.float32))
    kf = k.reshape(B, Dq, HW).astype(jnp.float32)
    wq_t = q_weight.astype(jnp.float32).T                # (Dq, hidden)
    bq2 = q_bias.astype(jnp.float32).reshape(1, hidden)
    wk = k_weight.astype(jnp.float32)                    # (hidden, Dq)
    bk2 = k_bias.astype(jnp.float32).reshape(hidden, 1)
    if mask is None:
        madd = jnp.zeros((B, 1, HW), jnp.float32)
    else:
        madd = jnp.where(mask.reshape(B, 1, HW), -jnp.inf, 0.0).astype(
            jnp.float32)

    # VMEM budget: double-buffered I/O tiles + resident weights + scratch +
    # generous temporary headroom; never below the default 32 MiB scope.
    est = 4 * (2 * (TQ * Dq + Dq * HW + TQ * NHW)
               + 2 * Dq * hidden + 2 * hidden + HW
               + hidden * HW
               + 6 * TQ * NHW)
    vmem_limit = int(min(100 * 2**20, max(32 * 2**20, est)))

    grid = (B, QP // TQ)
    kernel = functools.partial(_mha_map_kernel, num_heads=num_heads,
                               head_dim=C, norm=norm)

    out = pl.pallas_call(
        kernel,
        out_shape=jax.ShapeDtypeStruct((B, QP, NHW), jnp.float32),
        grid_spec=pltpu.PrefetchScalarGridSpec(
            num_scalar_prefetch=0,
            grid=grid,
            in_specs=[
                pl.BlockSpec((1, TQ, Dq), lambda b, t: (b, t, 0)),
                pl.BlockSpec((1, Dq, HW), lambda b, t: (b, 0, 0)),
                pl.BlockSpec((Dq, hidden), lambda b, t: (0, 0)),
                pl.BlockSpec((1, hidden), lambda b, t: (0, 0)),
                pl.BlockSpec((hidden, Dq), lambda b, t: (0, 0)),
                pl.BlockSpec((hidden, 1), lambda b, t: (0, 0)),
                pl.BlockSpec((1, 1, HW), lambda b, t: (b, 0, 0)),
            ],
            out_specs=pl.BlockSpec((1, TQ, NHW), lambda b, t: (b, t, 0)),
            scratch_shapes=[pltpu.VMEM((hidden, HW), jnp.float32)],
        ),
        compiler_params=pltpu.CompilerParams(
            dimension_semantics=("parallel", "arbitrary"),
            vmem_limit_bytes=vmem_limit,
        ),
    )(qf, kf, wq_t, bq2, wk, bk2, madd)

    return out[:, :Q, :].reshape(B, Q, num_heads, H, W)


def reference_mh_attention_map(q, k, q_weight, q_bias, k_weight, k_bias,
                               num_heads, mask=None):
    """Pure-JAX mirror of the PyTorch MHAttentionMap.forward math."""
    B, Q, Dq = q.shape
    hidden = q_weight.shape[0]
    N = num_heads
    C = hidden // N
    H, W = k.shape[-2:]
    norm = float(hidden / N) ** (-0.5)

    qp = q.astype(jnp.float32) @ q_weight.astype(jnp.float32).T + q_bias
    kp = (jnp.einsum('bdhw,ed->behw', k.astype(jnp.float32),
                     k_weight.astype(jnp.float32))
          + k_bias[None, :, None, None])
    qh = qp.reshape(B, Q, N, C)
    kh = kp.reshape(B, N, C, H, W)
    w = jnp.einsum('bqnc,bnchw->bqnhw', qh * norm, kh)
    if mask is not None:
        w = jnp.where(mask[:, None, None, :, :], -jnp.inf, w)
    flat = w.reshape(B, Q, -1)
    return jax.nn.softmax(flat, axis=-1).reshape(w.shape)


if __name__ == "__main__":
    key = jax.random.PRNGKey(0)
    B, Q, Dq, hidden, N, H, W = 2, 8, 32, 32, 4, 16, 16
    k1, k2, k3, k4, k5, k6, k7 = jax.random.split(key, 7)

    q = jax.random.normal(k1, (B, Q, Dq), jnp.float32)
    kfeat = jax.random.normal(k2, (B, Dq, H, W), jnp.float32)

    a = float(np.sqrt(6.0 / (Dq + hidden)))            # xavier_uniform bound
    q_w = jax.random.uniform(k3, (hidden, Dq), jnp.float32, -a, a)
    k_w = jax.random.uniform(k4, (hidden, Dq), jnp.float32, -a, a)
    q_b = 0.1 * jax.random.normal(k5, (hidden,), jnp.float32)
    k_b = 0.1 * jax.random.normal(k6, (hidden,), jnp.float32)

    # --- unmasked path --------------------------------------------------
    out = mh_attention_map(q, kfeat, q_w, q_b, k_w, k_b, N, mask=None)
    out = jax.block_until_ready(out)
    ref = reference_mh_attention_map(q, kfeat, q_w, q_b, k_w, k_b, N, mask=None)
    np.testing.assert_allclose(np.asarray(out), np.asarray(ref),
                               rtol=2e-3, atol=1e-4)

    # --- masked path ----------------------------------------------------
    mask = jax.random.uniform(k7, (B, H, W)) < 0.3
    mask = mask.at[:, 0, 0].set(False)                 # keep >=1 valid position
    out_m = mh_attention_map(q, kfeat, q_w, q_b, k_w, k_b, N, mask=mask)
    out_m = jax.block_until_ready(out_m)
    ref_m = reference_mh_attention_map(q, kfeat, q_w, q_b, k_w, k_b, N,
                                       mask=mask)
    np.testing.assert_allclose(np.asarray(out_m), np.asarray(ref_m),
                               rtol=2e-3, atol=1e-4)

    print("KERNEL_OK")
</pallas_src>

<mosaic_0001>
module attributes {stable_mosaic.version = 11 : i64} {
  func.func @_mha_map_kernel(%arg0: i32, %arg1: i32, %arg2: memref<1x8x32xf32, #tpu.memory_space<vmem>>, %arg3: memref<1x32x256xf32, #tpu.memory_space<vmem>>, %arg4: memref<32x32xf32, #tpu.memory_space<vmem>>, %arg5: memref<1x32xf32, #tpu.memory_space<vmem>>, %arg6: memref<32x32xf32, #tpu.memory_space<vmem>>, %arg7: memref<32x1xf32, #tpu.memory_space<vmem>>, %arg8: memref<1x1x256xf32, #tpu.memory_space<vmem>>, %arg9: memref<1x8x1024xf32, #tpu.memory_space<vmem>>, %arg10: memref<32x256xf32, #tpu.memory_space<vmem>>) attributes {dimension_semantics = [#tpu.dimension_semantics<parallel>, #tpu.dimension_semantics<arbitrary>], iteration_bounds = array<i64: 2, 1>, scalar_prefetch = 0 : i64, scratch_operands = 1 : i64, tpu.core_type = #tpu.core_type<tc>, window_params = [{transform_indices = @transform_0, window_bounds = array<i64: 1, 8, 32>}, {transform_indices = @transform_1, window_bounds = array<i64: 1, 32, 256>}, {pipeline_mode = #tpu.pipeline_mode<synchronous>, transform_indices = @transform_2, window_bounds = array<i64: 32, 32>}, {pipeline_mode = #tpu.pipeline_mode<synchronous>, transform_indices = @transform_3, window_bounds = array<i64: 1, 32>}, {pipeline_mode = #tpu.pipeline_mode<synchronous>, transform_indices = @transform_4, window_bounds = array<i64: 32, 32>}, {pipeline_mode = #tpu.pipeline_mode<synchronous>, transform_indices = @transform_5, window_bounds = array<i64: 32, 1>}, {transform_indices = @transform_6, window_bounds = array<i64: 1, 1, 256>}, {transform_indices = @transform_7, window_bounds = array<i64: 1, 8, 1024>}]} {
    %c0_i32 = arith.constant 0 : i32
    %0 = arith.cmpi eq, %arg1, %c0_i32 : i32
    %1 = arith.extui %0 : i1 to i32
    %c0_i32_0 = arith.constant 0 : i32
    %2 = arith.cmpi ne, %1, %c0_i32_0 : i32
    scf.if %2 {
      %c0_25 = arith.constant 0 : index
      %c0_26 = arith.constant 0 : index
      %48 = vector.load %arg6[%c0_25, %c0_26] : memref<32x32xf32, #tpu.memory_space<vmem>>, vector<32x32xf32>
      %c0_27 = arith.constant 0 : index
      %c0_28 = arith.constant 0 : index
      %c0_29 = arith.constant 0 : index
      %49 = vector.load %arg3[%c0_27, %c0_28, %c0_29] : memref<1x32x256xf32, #tpu.memory_space<vmem>>, vector<1x32x256xf32>
      %50 = vector.shape_cast %49 : vector<1x32x256xf32> to vector<32x256xf32>
      %cst_30 = arith.constant dense<0.000000e+00> : vector<32x256xf32>
      %51 = tpu.matmul %48, %50, %cst_30 {dimension_numbers = #tpu.dot_dimension_numbers<[1], [0], [0], [1], [0, 0, 1, 1], [], []>} : vector<32x32xf32>, vector<32x256xf32>, vector<32x256xf32> -> vector<32x256xf32>
      %c0_31 = arith.constant 0 : index
      %c0_32 = arith.constant 0 : index
      %52 = vector.load %arg7[%c0_31, %c0_32] : memref<32x1xf32, #tpu.memory_space<vmem>>, vector<32x1xf32>
      %53 = vector.broadcast %52 : vector<32x1xf32> to vector<32x256xf32>
      %54 = arith.addf %51, %53 : vector<32x256xf32>
      %c0_33 = arith.constant 0 : index
      %c0_34 = arith.constant 0 : index
      %55 = vector.load %arg10[%c0_33, %c0_34] : memref<32x256xf32, #tpu.memory_space<vmem>>, vector<32x256xf32>
      tpu.vector_store %arg10[%c0_33, %c0_34], %54 {strides = array<i32>} : memref<32x256xf32, #tpu.memory_space<vmem>>, vector<32x256xf32>,
    } else {
    }
    %c0 = arith.constant 0 : index
    %c0_1 = arith.constant 0 : index
    %c0_2 = arith.constant 0 : index
    %3 = vector.load %arg2[%c0, %c0_1, %c0_2] : memref<1x8x32xf32, #tpu.memory_space<vmem>>, vector<1x8x32xf32>
    %4 = vector.shape_cast %3 : vector<1x8x32xf32> to vector<8x32xf32>
    %c0_3 = arith.constant 0 : index
    %c0_4 = arith.constant 0 : index
    %5 = vector.load %arg4[%c0_3, %c0_4] : memref<32x32xf32, #tpu.memory_space<vmem>>, vector<32x32xf32>
    %cst = arith.constant dense<0.000000e+00> : vector<8x32xf32>
    %6 = tpu.matmul %4, %5, %cst {dimension_numbers = #tpu.dot_dimension_numbers<[1], [0], [0], [1], [0, 0, 1, 1], [], []>} : vector<8x32xf32>, vector<32x32xf32>, vector<8x32xf32> -> vector<8x32xf32>
    %c0_5 = arith.constant 0 : index
    %c0_6 = arith.constant 0 : index
    %7 = vector.load %arg5[%c0_5, %c0_6] : memref<1x32xf32, #tpu.memory_space<vmem>>, vector<1x32xf32>
    %8 = vector.broadcast %7 : vector<1x32xf32> to vector<8x32xf32>
    %9 = arith.addf %6, %8 : vector<8x32xf32>
    %cst_7 = arith.constant 0.353553385 : f32
    %10 = vector.broadcast %cst_7 : f32 to vector<8x32xf32>
    %11 = arith.mulf %9, %10 : vector<8x32xf32>
    %c0_8 = arith.constant 0 : index
    %c0_9 = arith.constant 0 : index
    %c0_10 = arith.constant 0 : index
    %12 = vector.load %arg8[%c0_8, %c0_9, %c0_10] : memref<1x1x256xf32, #tpu.memory_space<vmem>>, vector<1x1x256xf32>
    %13 = vector.shape_cast %12 : vector<1x1x256xf32> to vector<1x256xf32>
    %14 = vector.extract_strided_slice %11 {offsets = [0, 0], sizes = [8, 8], strides = [1, 1]} : vector<8x32xf32> to vector<8x8xf32>
    %c0_11 = arith.constant 0 : index
    %c0_12 = arith.constant 0 : index
    %15 = vector.load %arg10[%c0_11, %c0_12] : memref<32x256xf32, #tpu.memory_space<vmem>>, vector<8x256xf32>
    %cst_13 = arith.constant dense<0.000000e+00> : vector<8x256xf32>
    %16 = tpu.matmul %14, %15, %cst_13 {dimension_numbers = #tpu.dot_dimension_numbers<[1], [0], [0], [1], [0, 0, 1, 1], [], []>} : vector<8x8xf32>, vector<8x256xf32>, vector<8x256xf32> -> vector<8x256xf32>
    %17 = vector.broadcast %13 : vector<1x256xf32> to vector<8x256xf32>
    %18 = arith.addf %16, %17 : vector<8x256xf32>
    %19 = vector.extract_strided_slice %11 {offsets = [0, 8], sizes = [8, 8], strides = [1, 1]} : vector<8x32xf32> to vector<8x8xf32>
    %c8 = arith.constant 8 : index
    %c0_14 = arith.constant 0 : index
    %20 = vector.load %arg10[%c8, %c0_14] : memref<32x256xf32, #tpu.memory_space<vmem>>, vector<8x256xf32>
    %cst_15 = arith.constant dense<0.000000e+00> : vector<8x256xf32>
    %21 = tpu.matmul %19, %20, %cst_15 {dimension_numbers = #tpu.dot_dimension_numbers<[1], [0], [0], [1], [0, 0, 1, 1], [], []>} : vector<8x8xf32>, vector<8x256xf32>, vector<8x256xf32> -> vector<8x256xf32>
    %22 = vector.broadcast %13 : vector<1x256xf32> to vector<8x256xf32>
    %23 = arith.addf %21, %22 : vector<8x256xf32>
    %24 = vector.extract_strided_slice %11 {offsets = [0, 16], sizes = [8, 8], strides = [1, 1]} : vector<8x32xf32> to vector<8x8xf32>
    %c16 = arith.constant 16 : index
    %c0_16 = arith.constant 0 : index
    %25 = vector.load %arg10[%c16, %c0_16] : memref<32x256xf32, #tpu.memory_space<vmem>>, vector<8x256xf32>
    %cst_17 = arith.constant dense<0.000000e+00> : vector<8x256xf32>
    %26 = tpu.matmul %24, %25, %cst_17 {dimension_numbers = #tpu.dot_dimension_numbers<[1], [0], [0], [1], [0, 0, 1, 1], [], []>} : vector<8x8xf32>, vector<8x256xf32>, vector<8x256xf32> -> vector<8x256xf32>
    %27 = vector.broadcast %13 : vector<1x256xf32> to vector<8x256xf32>
    %28 = arith.addf %26, %27 : vector<8x256xf32>
    %29 = vector.extract_strided_slice %11 {offsets = [0, 24], sizes = [8, 8], strides = [1, 1]} : vector<8x32xf32> to vector<8x8xf32>
    %c24 = arith.constant 24 : index
    %c0_18 = arith.constant 0 : index
    %30 = vector.load %arg10[%c24, %c0_18] : memref<32x256xf32, #tpu.memory_space<vmem>>, vector<8x256xf32>
    %cst_19 = arith.constant dense<0.000000e+00> : vector<8x256xf32>
    %31 = tpu.matmul %29, %30, %cst_19 {dimension_numbers = #tpu.dot_dimension_numbers<[1], [0], [0], [1], [0, 0, 1, 1], [], []>} : vector<8x8xf32>, vector<8x256xf32>, vector<8x256xf32> -> vector<8x256xf32>
    %32 = vector.broadcast %13 : vector<1x256xf32> to vector<8x256xf32>
    %33 = arith.addf %31, %32 : vector<8x256xf32>
    %34 = tpu.concatenate %18, %23, %28, %33 in 1 : vector<8x256xf32>, vector<8x256xf32>, vector<8x256xf32>, vector<8x256xf32> -> vector<8x1024xf32>
    %cst_20 = arith.constant dense<0xFF800000> : vector<8xf32>
    %35 = vector.multi_reduction <maximumf>, %34, %cst_20 [1] : vector<8x1024xf32> to vector<8xf32>
    %36 = vector.shape_cast %35 : vector<8xf32> to vector<8x1xf32>
    %37 = vector.broadcast %36 : vector<8x1xf32> to vector<8x1024xf32>
    %38 = arith.subf %34, %37 : vector<8x1024xf32>
    %39 = math.exp %38 : vector<8x1024xf32>
    %cst_21 = arith.constant dense<0.000000e+00> : vector<8xf32>
    %40 = vector.multi_reduction <add>, %39, %cst_21 [1] : vector<8x1024xf32> to vector<8xf32>
    %41 = vector.shape_cast %40 : vector<8xf32> to vector<8x1xf32>
    %42 = tpu.reciprocal %41 : vector<8x1xf32> -> vector<8x1xf32>
    %43 = vector.broadcast %42 : vector<8x1xf32> to vector<8x1024xf32>
    %44 = arith.mulf %39, %43 : vector<8x1024xf32>
    %c0_22 = arith.constant 0 : index
    %c0_23 = arith.constant 0 : index
    %c0_24 = arith.constant 0 : index
    %45 = vector.load %arg9[%c0_22, %c0_23, %c0_24] : memref<1x8x1024xf32, #tpu.memory_space<vmem>>, vector<1x8x1024xf32>
    %46 = vector.shape_cast %45 : vector<1x8x1024xf32> to vector<8x1024xf32>
    %47 = vector.shape_cast %44 : vector<8x1024xf32> to vector<1x8x1024xf32>
    tpu.vector_store %arg9[%c0_22, %c0_23, %c0_24], %47 {strides = array<i32>} : memref<1x8x1024xf32, #tpu.memory_space<vmem>>, vector<1x8x1024xf32>,
    return
  }
  func.func @transform_0(%arg0: i32, %arg1: i32) -> (i32, i32, i32) {
    %c0_i32 = arith.constant 0 : i32
    %c0_i32_0 = arith.constant 0 : i32
    return %arg0, %arg1, %c0_i32 : i32, i32, i32
  }
  func.func @transform_1(%arg0: i32, %arg1: i32) -> (i32, i32, i32) {
    %c0_i32 = arith.constant 0 : i32
    %c0_i32_0 = arith.constant 0 : i32
    %c0_i32_1 = arith.constant 0 : i32
    return %arg0, %c0_i32, %c0_i32_0 : i32, i32, i32
  }
  func.func @transform_2(%arg0: i32, %arg1: i32) -> (i32, i32) {
    %c0_i32 = arith.constant 0 : i32
    %c0_i32_0 = arith.constant 0 : i32
    %c0_i32_1 = arith.constant 0 : i32
    return %c0_i32, %c0_i32_0 : i32, i32
  }
  func.func @transform_3(%arg0: i32, %arg1: i32) -> (i32, i32) {
    %c0_i32 = arith.constant 0 : i32
    %c0_i32_0 = arith.constant 0 : i32
    %c0_i32_1 = arith.constant 0 : i32
    return %c0_i32, %c0_i32_0 : i32, i32
  }
  func.func @transform_4(%arg0: i32, %arg1: i32) -> (i32, i32) {
    %c0_i32 = arith.constant 0 : i32
    %c0_i32_0 = arith.constant 0 : i32
    %c0_i32_1 = arith.constant 0 : i32
    return %c0_i32, %c0_i32_0 : i32, i32
  }
  func.func @transform_5(%arg0: i32, %arg1: i32) -> (i32, i32) {
    %c0_i32 = arith.constant 0 : i32
    %c0_i32_0 = arith.constant 0 : i32
    %c0_i32_1 = arith.constant 0 : i32
    return %c0_i32, %c0_i32_0 : i32, i32
  }
  func.func @transform_6(%arg0: i32, %arg1: i32) -> (i32, i32, i32) {
    %c0_i32 = arith.constant 0 : i32
    %c0_i32_0 = arith.constant 0 : i32
    %c0_i32_1 = arith.constant 0 : i32
    return %arg0, %c0_i32, %c0_i32_0 : i32, i32, i32
  }
  func.func @transform_7(%arg0: i32, %arg1: i32) -> (i32, i32, i32) {
    %c0_i32 = arith.constant 0 : i32
    %c0_i32_0 = arith.constant 0 : i32
    return %arg0, %arg1, %c0_i32 : i32, i32, i32
  }
}

</mosaic_0001>

<llo_original>
// kernel: tpu_custom_call.1
$region0: #{tpu_custom_call.1}
  #allocation0 [shape = 'u32[]', space=smem, size = 0x4, offset = 0x4, fixed_abs, tag = 'smem constant byte address 0x4 - core index']
  #allocation1 [shape = 'u32[72,128]{1,0:T(1,128)}', space=vmem, size = 0x9000, scoped, tag = 'internal scratch']
  #allocation2 [shape = 'f32[32,256]{1,0:T(8,128)}', space=vmem, size = 0x8000, scoped, tag = 'scratch operand']
  %s0 = inlined_call_operand.hbm [shape: f32[2,8,32], index: 0, kind: input, shape index: {}]
  %s1 = inlined_call_operand.hbm [shape: f32[2,32,256], index: 1, kind: input, shape index: {}]
  %s2 = inlined_call_operand.vmem [shape: f32[32,32], index: 2, kind: input, shape index: {}]
  %s3 = inlined_call_operand.vmem [shape: f32[1,32], index: 3, kind: input, shape index: {}]
  %s4 = inlined_call_operand.hbm [shape: f32[32,32], index: 4, kind: input, shape index: {}]
  %s5 = inlined_call_operand.vmem [shape: f32[32,1], index: 5, kind: input, shape index: {}]
  %s6 = inlined_call_operand.vmem [shape: f32[2,1,256], index: 6, kind: input, shape index: {}]
  %s7 = inlined_call_operand.hbm [shape: f32[2,8,1024], index: 7, kind: output, shape index: {}]
  %s8 = sld [smem:[#allocation0]]
  $region77: #{tpu_custom_call.1} parent=0
    _
  %s10 = ssub.s32 1, %s8
  %s11 = scalar_select 0, %s10, %s8
  $region1: #{tpu_custom_call.1} parent=0
    #allocation3 [shape = 'u8[8192]{0}', space=vmem, size = 0x2000, scoped, tag = 'input window, operand 0']
    #allocation4 [shape = 's32[2]{0}', space=sflag, size = 0x8, scoped, tag = 'scoped memory for tpu_custom_call.1']
    #allocation5 [shape = 's32[2]{0}', space=sflag, size = 0x8, scoped, tag = 'scoped memory for tpu_custom_call.1']
    #allocation6 [shape = 'u8[65536]{0}', space=vmem, size = 0x10000, scoped, tag = 'input window, operand 1']
    #allocation7 [shape = 's32[2]{0}', space=sflag, size = 0x8, scoped, tag = 'scoped memory for tpu_custom_call.1']
    #allocation8 [shape = 'u8[16384]{0}', space=vmem, size = 0x4000, scoped, tag = 'input window, operand 4, single buffered']
    #allocation9 [shape = 'u8[65536]{0}', space=vmem, size = 0x10000, scoped, tag = 'output window, operand 0']
    %12 = vsyncpa [#allocation4], 0
    %s13 = scalar_lea.sflag [#allocation4], 1
    %14 = vsyncpa %s13, 0
    %15 = vsyncpa [#allocation7], 0
    %s16 = scalar_lea.sflag [#allocation7], 1
    %17 = vsyncpa %s16, 0
    %18 = vsyncpa [#allocation5], 0
    %s19 = scalar_lea.sflag [#allocation5], 1
    %20 = vsyncpa %s19, 0
    loop: start=0, step=1, limit=4
    $region2: #{tpu_custom_call.1} parent=1 // loop_pre_header
      _
    $region3: #{tpu_custom_call.1} parent=1 // loop_header
      %s22 = sphi 0, %s26
      %p23 = scmp.ge.s32.totalorder %s22, 4
      %s29 = sphi 0, %s41
      %s30 = sphi 0, %s37
      %s31 = sphi 0, %s29
      %s32 = sphi 0, %s30
      %s33 = sphi 0, %s31
      %s34 = sphi 0, %s32
      %s46 = sphi 0, %s48
      %s49 = sphi 0, %s46
      %s50 = sphi 0, %s49
      %s66 = sphi 0, %s50
      %s72 = sphi 0, %s74
      %s75 = sphi 0, %s72
      %s76 = sphi 0, %s75
      %s92 = sphi 0, %s76
      %s96 = sphi 0, %s96
      %s98 = sphi 0, %s96
      %s99 = sphi 0, %s98
      %s113 = sphi 0, %s99
      %s117 = sphi 0, %s117
      %s119 = sphi 0, %s117
      %s120 = sphi 0, %s119
      %s134 = sphi 0, %s120
      %s138 = sphi 0, %s138
      %s140 = sphi 0, %s138
      %s141 = sphi 0, %s140
      %s155 = sphi 0, %s141
      %s159 = sphi 0, %s159
      %s161 = sphi 0, %s159
      %s162 = sphi 0, %s161
      %s176 = sphi 0, %s162
      %s182 = sphi 0, %s184
      %s185 = sphi 0, %s182
      %s186 = sphi 0, %s185
      %s202 = sphi 0, %s186
      %s210 = sphi 0, %s212
      %s213 = sphi 0, %s210
      %s214 = sphi 0, %s213
      %s230 = sphi 0, %s214
    $region4: #{tpu_custom_call.1} parent=1 // loop_header_branch
      %25 = sbr.rel (%p23) target = $region8
    $region5: #{tpu_custom_call.1} parent=1 // loop_body
      %s27 = ssub.s32 %s22, 1
      %s28 = ssub.s32 %s22, 2
      %s35 = sadd.s32 1, %s30
      %p36 = scmp.ge.s32.totalorder %s35, 1
      %s37 = scalar_select %p36, 0, %s35
      %s38 = sadd.s32 1, %s29
      %s39 = scalar_select %p36, %s38, %s29
      %p40 = scmp.ge.s32.totalorder %s39, 2
      %s41 = scalar_select %p40, 0, %s39
      %s42 = ssub.s32 %s29, %s41
      %s43 = ssub.s32 %s30, %s37
      %s44 = sor.u32 %s42, %s43
      %p45 = scmp.eq.s32.totalorder %s44, 0
      %s47 = sadd.s32 %s46, 1
      %s48 = scalar_select %p45, %s46, %s47
      %p51 = pneg %p45
      %p52 = scmp.eq.s32.totalorder %s22, 1
      %p53 = por %p51, %p52
      %p54 = scmp.ne.s32.totalorder %s46, %s49
      %p55 = scmp.eq.s32.totalorder %s22, 0
      %p56 = por %p54, %p55
      %p57 = scmp.ne.s32.totalorder %s46, %s49
      %p58 = scmp.eq.s32.totalorder %s27, 1
      %p59 = por %p57, %p58
      %p60 = scmp.ne.s32.totalorder %s49, %s50
      %p61 = scmp.eq.s32.totalorder %s27, 0
      %p62 = por %p60, %p61
      %p63 = scmp.ne.s32.totalorder %s49, %s50
      %p64 = scmp.eq.s32.totalorder %s28, 1
      %p65 = por %p63, %p64
      %p67 = scmp.ne.s32.totalorder %s50, %s66
      %p68 = scmp.eq.s32.totalorder %s28, 0
      %p69 = por %p67, %p68
      %s70 = ssub.s32 %s29, %s41
      %p71 = scmp.eq.s32.totalorder %s70, 0
      %s73 = sadd.s32 %s72, 1
      %s74 = scalar_select %p71, %s72, %s73
      %p77 = pneg %p71
      %p78 = scmp.eq.s32.totalorder %s22, 1
      %p79 = por %p77, %p78
      %p80 = scmp.ne.s32.totalorder %s72, %s75
      %p81 = scmp.eq.s32.totalorder %s22, 0
      %p82 = por %p80, %p81
      %p83 = scmp.ne.s32.totalorder %s72, %s75
      %p84 = scmp.eq.s32.totalorder %s27, 1
      %p85 = por %p83, %p84
      %p86 = scmp.ne.s32.totalorder %s75, %s76
      %p87 = scmp.eq.s32.totalorder %s27, 0
      %p88 = por %p86, %p87
      %p89 = scmp.ne.s32.totalorder %s75, %s76
      %p90 = scmp.eq.s32.totalorder %s28, 1
      %p91 = por %p89, %p90
      %p93 = scmp.ne.s32.totalorder %s76, %s92
      %p94 = scmp.eq.s32.totalorder %s28, 0
      %p95 = por %p93, %p94
      %s97 = sadd.s32 %s96, 1
      %p100 = scmp.eq.s32.totalorder %s22, 1
      %p101 = scmp.ne.s32.totalorder %s96, %s98
      %p102 = scmp.eq.s32.totalorder %s22, 0
      %p103 = por %p101, %p102
      %p104 = scmp.ne.s32.totalorder %s96, %s98
      %p105 = scmp.eq.s32.totalorder %s27, 1
      %p106 = por %p104, %p105
      %p107 = scmp.ne.s32.totalorder %s98, %s99
      %p108 = scmp.eq.s32.totalorder %s27, 0
      %p109 = por %p107, %p108
      %p110 = scmp.ne.s32.totalorder %s98, %s99
      %p111 = scmp.eq.s32.totalorder %s28, 1
      %p112 = por %p110, %p111
      %p114 = scmp.ne.s32.totalorder %s99, %s113
      %p115 = scmp.eq.s32.totalorder %s28, 0
      %p116 = por %p114, %p115
      %s118 = sadd.s32 %s117, 1
      %p121 = scmp.eq.s32.totalorder %s22, 1
      %p122 = scmp.ne.s32.totalorder %s117, %s119
      %p123 = scmp.eq.s32.totalorder %s22, 0
      %p124 = por %p122, %p123
      %p125 = scmp.ne.s32.totalorder %s117, %s119
      %p126 = scmp.eq.s32.totalorder %s27, 1
      %p127 = por %p125, %p126
      %p128 = scmp.ne.s32.totalorder %s119, %s120
      %p129 = scmp.eq.s32.totalorder %s27, 0
      %p130 = por %p128, %p129
      %p131 = scmp.ne.s32.totalorder %s119, %s120
      %p132 = scmp.eq.s32.totalorder %s28, 1
      %p133 = por %p131, %p132
      %p135 = scmp.ne.s32.totalorder %s120, %s134
      %p136 = scmp.eq.s32.totalorder %s28, 0
      %p137 = por %p135, %p136
      %s139 = sadd.s32 %s138, 1
      %p142 = scmp.eq.s32.totalorder %s22, 1
      %p143 = scmp.ne.s32.totalorder %s138, %s140
      %p144 = scmp.eq.s32.totalorder %s22, 0
      %p145 = por %p143, %p144
      %p146 = scmp.ne.s32.totalorder %s138, %s140
      %p147 = scmp.eq.s32.totalorder %s27, 1
      %p148 = por %p146, %p147
      %p149 = scmp.ne.s32.totalorder %s140, %s141
      %p150 = scmp.eq.s32.totalorder %s27, 0
      %p151 = por %p149, %p150
      %p152 = scmp.ne.s32.totalorder %s140, %s141
      %p153 = scmp.eq.s32.totalorder %s28, 1
      %p154 = por %p152, %p153
      %p156 = scmp.ne.s32.totalorder %s141, %s155
      %p157 = scmp.eq.s32.totalorder %s28, 0
      %p158 = por %p156, %p157
      %s160 = sadd.s32 %s159, 1
      %p163 = scmp.eq.s32.totalorder %s22, 1
      %p164 = scmp.ne.s32.totalorder %s159, %s161
      %p165 = scmp.eq.s32.totalorder %s22, 0
      %p166 = por %p164, %p165
      %p167 = scmp.ne.s32.totalorder %s159, %s161
      %p168 = scmp.eq.s32.totalorder %s27, 1
      %p169 = por %p167, %p168
      %p170 = scmp.ne.s32.totalorder %s161, %s162
      %p171 = scmp.eq.s32.totalorder %s27, 0
      %p172 = por %p170, %p171
      %p173 = scmp.ne.s32.totalorder %s161, %s162
      %p174 = scmp.eq.s32.totalorder %s28, 1
      %p175 = por %p173, %p174
      %p177 = scmp.ne.s32.totalorder %s162, %s176
      %p178 = scmp.eq.s32.totalorder %s28, 0
      %p179 = por %p177, %p178
      %s180 = ssub.s32 %s29, %s41
      %p181 = scmp.eq.s32.totalorder %s180, 0
      %s183 = sadd.s32 %s182, 1
      %s184 = scalar_select %p181, %s182, %s183
      %p187 = pneg %p181
      %p188 = scmp.eq.s32.totalorder %s22, 1
      %p189 = por %p187, %p188
      %p190 = scmp.ne.s32.totalorder %s182, %s185
      %p191 = scmp.eq.s32.totalorder %s22, 0
      %p192 = por %p190, %p191
      %p193 = scmp.ne.s32.totalorder %s182, %s185
      %p194 = scmp.eq.s32.totalorder %s27, 1
      %p195 = por %p193, %p194
      %p196 = scmp.ne.s32.totalorder %s185, %s186
      %p197 = scmp.eq.s32.totalorder %s27, 0
      %p198 = por %p196, %p197
      %p199 = scmp.ne.s32.totalorder %s185, %s186
      %p200 = scmp.eq.s32.totalorder %s28, 1
      %p201 = por %p199, %p200
      %p203 = scmp.ne.s32.totalorder %s186, %s202
      %p204 = scmp.eq.s32.totalorder %s28, 0
      %p205 = por %p203, %p204
      %s206 = ssub.s32 %s29, %s41
      %s207 = ssub.s32 %s30, %s37
      %s208 = sor.u32 %s206, %s207
      %p209 = scmp.eq.s32.totalorder %s208, 0
      %s211 = sadd.s32 %s210, 1
      %s212 = scalar_select %p209, %s210, %s211
      %p215 = pneg %p209
      %p216 = scmp.eq.s32.totalorder %s22, 1
      %p217 = por %p215, %p216
      %p218 = scmp.ne.s32.totalorder %s210, %s213
      %p219 = scmp.eq.s32.totalorder %s22, 0
      %p220 = por %p218, %p219
      %p221 = scmp.ne.s32.totalorder %s210, %s213
      %p222 = scmp.eq.s32.totalorder %s27, 1
      %p223 = por %p221, %p222
      %p224 = scmp.ne.s32.totalorder %s213, %s214
      %p225 = scmp.eq.s32.totalorder %s27, 0
      %p226 = por %p224, %p225
      %p227 = scmp.ne.s32.totalorder %s213, %s214
      %p228 = scmp.eq.s32.totalorder %s28, 1
      %p229 = por %p227, %p228
      %p231 = scmp.ne.s32.totalorder %s214, %s230
      %p232 = scmp.eq.s32.totalorder %s28, 0
      %p233 = por %p231, %p232
      %p234 = scmp.le.s32.totalorder 1, %s22
      %p235 = scmp.lt.s32.totalorder %s22, 3
      %p236 = pnand %p234, %p235
      %p237 = pneg %p236
      // Predicated region
      $region9: #{tpu_custom_call.1} parent=5 // pred_check
        _
      $region10: #{tpu_custom_call.1} parent=5 // pred_check_branch
        %239 = sbr.rel (%p236) target = $region12
      $region11: #{tpu_custom_call.1} parent=5 // pred_region
        %s240 = ssub.s32 %s22, 1
        // Predicated region
        $region13: #{tpu_custom_call.1} parent=11 // pred_check
          %p241 = pneg %p109
        $region14: #{tpu_custom_call.1} parent=11 // pred_check_branch
          %243 = sbr.rel (%p241) target = $region16
        $region15: #{tpu_custom_call.1} parent=11 // pred_region
          _
        $region16: #{tpu_custom_call.1} parent=11 // pred_fallthru
          _
        // Predicated region
        $region17: #{tpu_custom_call.1} parent=11 // pred_check
          %p244 = pneg %p130
        $region18: #{tpu_custom_call.1} parent=11 // pred_check_branch
          %246 = sbr.rel (%p244) target = $region20
        $region19: #{tpu_custom_call.1} parent=11 // pred_region
          _
        $region20: #{tpu_custom_call.1} parent=11 // pred_fallthru
          _
        // Predicated region
        $region21: #{tpu_custom_call.1} parent=11 // pred_check
          %p247 = pneg %p151
        $region22: #{tpu_custom_call.1} parent=11 // pred_check_branch
          %249 = sbr.rel (%p247) target = $region24
        $region23: #{tpu_custom_call.1} parent=11 // pred_region
          %251 = vsyncadd [#allocation7], 0
          %s252 = sshll.u32 %s4, 4
          %s253 = int_to_ptr.hbm [resolvable:$true] %s252
          %s254 = sshll.u32 [#allocation8], 4
          %s255 = int_to_ptr.vmem [resolvable:$true] %s254
          %260 = dma.hbm_to_vmem [thread:$0]  %s253, 512, %s255, [#allocation7], 128, 128, 8
        $region24: #{tpu_custom_call.1} parent=11 // pred_fallthru
          _
        // Predicated region
        $region25: #{tpu_custom_call.1} parent=11 // pred_check
          %p261 = pneg %p172
        $region26: #{tpu_custom_call.1} parent=11 // pred_check_branch
          %263 = sbr.rel (%p261) target = $region28
        $region27: #{tpu_custom_call.1} parent=11 // pred_region
          _
        $region28: #{tpu_custom_call.1} parent=11 // pred_fallthru
          _
      $region12: #{tpu_custom_call.1} parent=5 // pred_fallthru
        _
      %p264 = scmp.lt.s32.totalorder %s22, 2
      // Predicated region
      $region29: #{tpu_custom_call.1} parent=5 // pred_check
        %p265 = pneg %p264
      $region30: #{tpu_custom_call.1} parent=5 // pred_check_branch
        %267 = sbr.rel (%p265) target = $region32
      $region31: #{tpu_custom_call.1} parent=5 // pred_region
        // Predicated region
        $region33: #{tpu_custom_call.1} parent=31 // pred_check
          %p268 = pneg %p56
        $region34: #{tpu_custom_call.1} parent=31 // pred_check_branch
          %270 = sbr.rel (%p268) target = $region36
        $region35: #{tpu_custom_call.1} parent=31 // pred_region
          %s271 = sand.u32 %s46, 1
          %s272 = scalar_lea.sflag [#allocation4], %s271
          %s273 = sand.u32 %s46, 1
          %s274 = smul.addr %s273, 8
          %s275 = scalar_lea.vmem [#allocation3], %s274
          %277 = vsyncadd %s272, 0
          %s278 = sadd.s32 %s30, %s29
          %s279 = smul.addr %s278, 8
          %s280 = scalar_lea.hbm %s0, %s279
          %s282 = sshll.u32 %s280, 4
          %s283 = int_to_ptr.hbm [resolvable:$true] %s282
          %s284 = sshll.u32 %s275, 4
          %s285 = int_to_ptr.vmem [resolvable:$true] %s284
          %287 = dma.hbm_to_vmem [thread:$0]  %s283, 128, %s285, %s272
        $region36: #{tpu_custom_call.1} parent=31 // pred_fallthru
          _
        // Predicated region
        $region37: #{tpu_custom_call.1} parent=31 // pred_check
          %p288 = pneg %p82
        $region38: #{tpu_custom_call.1} parent=31 // pred_check_branch
          %290 = sbr.rel (%p288) target = $region40
        $region39: #{tpu_custom_call.1} parent=31 // pred_region
          %s291 = sand.u32 %s22, 1
          %s292 = scalar_lea.sflag [#allocation7], %s291
          %s293 = sand.u32 %s72, 1
          %s294 = smul.addr %s293, 64
          %s295 = scalar_lea.vmem [#allocation6], %s294
          %297 = vsyncadd %s292, 0
          %s298 = smul.addr %s29, 8
          %s299 = smul.addr %s298, 8
          %s300 = scalar_lea.hbm %s1, %s299
          %s301 = sshll.u32 %s300, 4
          %s302 = int_to_ptr.hbm [resolvable:$true] %s301
          %s303 = sshll.u32 %s295, 4
          %s304 = int_to_ptr.vmem [resolvable:$true] %s303
          %309 = dma.hbm_to_vmem [thread:$0]  %s302, 1024, %s304, %s292, 256, 256, 16
        $region40: #{tpu_custom_call.1} parent=31 // pred_fallthru
          _
        // Predicated region
        $region41: #{tpu_custom_call.1} parent=31 // pred_check
          %p310 = pneg %p192
        $region42: #{tpu_custom_call.1} parent=31 // pred_check_branch
          %312 = sbr.rel (%p310) target = $region44
        $region43: #{tpu_custom_call.1} parent=31 // pred_region
          %p313 = scmp.lt.s32.totalorder %s29, 1
          %s314 = scalar_select %p313, %s29, 1
          %s315 = smul.addr %s314, 2
          %s316 = scalar_lea.vmem %s6, %s315
        $region44: #{tpu_custom_call.1} parent=31 // pred_fallthru
          _
      $region32: #{tpu_custom_call.1} parent=5 // pred_fallthru
        _
      %p317 = scmp.le.s32.totalorder 1, %s22
      %p318 = scmp.lt.s32.totalorder %s22, 3
      %p319 = pnand %p317, %p318
      %p320 = pneg %p319
      // Predicated region
      $region45: #{tpu_custom_call.1} parent=5 // pred_check
        _
      $region46: #{tpu_custom_call.1} parent=5 // pred_check_branch
        %322 = sbr.rel (%p319) target = $region48
      $region47: #{tpu_custom_call.1} parent=5 // pred_region
        %s323 = ssub.s32 %s22, 1
        %s324 = sand.u32 %s49, 1
        %s325 = scalar_lea.sflag [#allocation4], %s324
        %s326 = sand.u32 %s49, 1
        %s327 = smul.addr %s326, 8
        %s328 = scalar_lea.vmem [#allocation3], %s327
        // Predicated region
        $region49: #{tpu_custom_call.1} parent=47 // pred_check
          %p329 = pneg %p62
        $region50: #{tpu_custom_call.1} parent=47 // pred_check_branch
          %331 = sbr.rel (%p329) target = $region52
        $region51: #{tpu_custom_call.1} parent=47 // pred_region
          %333 = dma.done %s325, 128
        $region52: #{tpu_custom_call.1} parent=47 // pred_fallthru
          _
        %s334 = sand.u32 %s27, 1
        %s335 = scalar_lea.sflag [#allocation7], %s334
        %s336 = sand.u32 %s75, 1
        %s337 = smul.addr %s336, 64
        %s338 = scalar_lea.vmem [#allocation6], %s337
        // Predicated region
        $region53: #{tpu_custom_call.1} parent=47 // pred_check
          %p339 = pneg %p88
        $region54: #{tpu_custom_call.1} parent=47 // pred_check_branch
          %341 = sbr.rel (%p339) target = $region56
        $region55: #{tpu_custom_call.1} parent=47 // pred_region
          %343 = dma.done %s335, 1024
        $region56: #{tpu_custom_call.1} parent=47 // pred_fallthru
          _
        // Predicated region
        $region57: #{tpu_custom_call.1} parent=47 // pred_check
          %p344 = pneg %p151
        $region58: #{tpu_custom_call.1} parent=47 // pred_check_branch
          %346 = sbr.rel (%p344) target = $region60
        $region59: #{tpu_custom_call.1} parent=47 // pred_region
          %348 = dma.done [#allocation7], 512
        $region60: #{tpu_custom_call.1} parent=47 // pred_fallthru
          _
        %s349 = sand.u32 %s49, 1
        %s350 = scalar_lea.sflag [#allocation4], %s349
        %s351 = sand.u32 %s49, 1
        %s352 = smul.addr %s351, 8
        %s353 = scalar_lea.vmem [#allocation3], %s352
        %p354 = pneg %p62
        %p355 = pneg %p59
        %s356 = sand.u32 %s27, 1
        %s357 = scalar_lea.sflag [#allocation7], %s356
        %s358 = sand.u32 %s75, 1
        %s359 = smul.addr %s358, 64
        %s360 = scalar_lea.vmem [#allocation6], %s359
        %p361 = pneg %p88
        %p362 = pneg %p85
        %p363 = pneg %p109
        %p364 = pneg %p106
        %p365 = pneg %p130
        %p366 = pneg %p127
        %p367 = pneg %p151
        %p368 = pneg %p148
        %p369 = pneg %p172
        %p370 = pneg %p169
        %p371 = scmp.lt.s32.totalorder %s31, 1
        %s372 = scalar_select %p371, %s31, 1
        %s373 = smul.addr %s372, 2
        %s374 = scalar_lea.vmem %s6, %s373
        %p375 = pneg %p198
        %p376 = pneg %p195
        %p377 = pneg %p226
        %p378 = pneg %p223
        %s379 = sand.u32 %s213, 1
        %s380 = scalar_lea.sflag [#allocation5], %s379
        %s381 = sand.u32 %s213, 1
        %s382 = smul.addr %s381, 64
        %s383 = scalar_lea.vmem [#allocation9], %s382
        %p384 = scmp.lt.s32.totalorder %s31, 1
        %s385 = scalar_select %p384, %s31, 1
        %s386 = smul.addr %s385, 2
        %s387 = scalar_lea.vmem %s6, %s386
        %p388 = scmp.eq.s32.totalorder %s32, 0
        // Predicated region
        $region61: #{tpu_custom_call.1} parent=47 // pred_check
          %p389 = pneg %p388
        $region62: #{tpu_custom_call.1} parent=47 // pred_check_branch
          %391 = sbr.rel (%p389) target = $region64
        $region63: #{tpu_custom_call.1} parent=47 // pred_region
          %v392 = vld [vmem:[#allocation8] sm:$0xff]
          %v393 = vld [vmem:[#allocation8 + $0x8] sm:$0xff]
          %v394 = vld [vmem:[#allocation8 + $0x10] sm:$0xff]
          %v395 = vld [vmem:[#allocation8 + $0x18] sm:$0xff]
          %v396 = vld [vmem:[%s338] sm:$0xff]
          %v397 = vld [vmem:[%s338 + $0x8] sm:$0xff]
          %v398 = vld [vmem:[%s338 + $0x10] sm:$0xff]
          %v399 = vld [vmem:[%s338 + $0x18] sm:$0xff]
          %v400 = vld [vmem:[%s338 + $0x20] sm:$0xff]
          %v401 = vld [vmem:[%s338 + $0x28] sm:$0xff]
          %v402 = vld [vmem:[%s338 + $0x30] sm:$0xff]
          %v403 = vld [vmem:[%s338 + $0x38] sm:$0xff]
          %v404 = vld [vmem:[%s5] sm:$0xff]
          %v405 = vld [vmem:[%s5 + $0x8] sm:$0xff]
          %v406 = vld [vmem:[%s5 + $0x10] sm:$0xff]
          %v407 = vld [vmem:[%s5 + $0x18] sm:$0xff]
          %409 = vset.pattern.permute.xlu0 0
          %410 = vperm.xlu0 %409, %v404
          %v411 = vpop.permute.xlu0 %410
          %414 = vset.pattern.permute.xlu0 0
          %415 = vperm.xlu0 %414, %v405
          %v416 = vpop.permute.xlu0 %415
          %419 = vset.pattern.permute.xlu0 0
          %420 = vperm.xlu0 %419, %v406
          %v421 = vpop.permute.xlu0 %420
          %424 = vset.pattern.permute.xlu0 0
          %425 = vperm.xlu0 %424, %v407
          %v426 = vpop.permute.xlu0 %425
          %vm428 = vcmask 261120
          %v430 = vsel %vm428, %v392, 0
          %v433 = vsel %vm428, %v393, 0
          %v436 = vsel %vm428, %v394, 0
          %v439 = vsel %vm428, %v395, 0
          %441 = vmatpush.msra.mxu0 0.0
          %442 = vmatpush.msra.mxu0 0.0
          %443 = vmatpush.msra.mxu0 0.0
          %444 = vmatpush.msra.mxu0 0.0
          %445 = vmatpush.msra.mxu0 0.0
          %446 = vmatpush.msra.mxu0 0.0
          %447 = vmatpush.msra.mxu0 0.0
          %448 = vmatpush.msra.mxu0 0.0
          %449 = vmatpush.msra.mxu0 0.0
          %450 = vmatpush.msra.mxu0 0.0
          %451 = vmatpush.msra.mxu0 0.0
          %452 = vmatpush.msra.mxu0 0.0
          %453 = vmatpush.msra.mxu0 %v402
          %454 = vmatpush.msra.mxu0 %v400
          %455 = vmatpush.msra.mxu0 %v398
          %456 = vmatpush.msra.mxu0 %v396
          %457 = vmatmul.f32.gmra.mxu0 %v430
          %v458 = vpop.f32.mrf.mxu0
          %v459 = vadd.f32 %v411, %v458
          %460 = vmatmul.f32.gmra.mxu0 %v433
          %v461 = vpop.f32.mrf.mxu0
          %v462 = vadd.f32 %v416, %v461
          %463 = vmatmul.f32.gmra.mxu0 %v436
          %v464 = vpop.f32.mrf.mxu0
          %v465 = vadd.f32 %v421, %v464
          %466 = vmatmul.f32.gmra.mxu0 %v439
          %v467 = vpop.f32.mrf.mxu0
          %v468 = vadd.f32 %v426, %v467
          %469 = vdwg.mxu0
          %470 = vmatpush.msra.mxu0 0.0
          %471 = vmatpush.msra.mxu0 0.0
          %472 = vmatpush.msra.mxu0 0.0
          %473 = vmatpush.msra.mxu0 0.0
          %474 = vmatpush.msra.mxu0 0.0
          %475 = vmatpush.msra.mxu0 0.0
          %476 = vmatpush.msra.mxu0 0.0
          %477 = vmatpush.msra.mxu0 0.0
          %478 = vmatpush.msra.mxu0 0.0
          %479 = vmatpush.msra.mxu0 0.0
          %480 = vmatpush.msra.mxu0 0.0
          %481 = vmatpush.msra.mxu0 0.0
          %482 = vmatpush.msra.mxu0 %v403
          %483 = vmatpush.msra.mxu0 %v401
          %484 = vmatpush.msra.mxu0 %v399
          %485 = vmatpush.msra.mxu0 %v397
          %486 = vmatmul.f32.gmra.mxu0 %v430
          %v487 = vpop.f32.mrf.mxu0
          %v488 = vadd.f32 %v411, %v487
          %489 = vmatmul.f32.gmra.mxu0 %v433
          %v490 = vpop.f32.mrf.mxu0
          %v491 = vadd.f32 %v416, %v490
          %492 = vmatmul.f32.gmra.mxu0 %v436
          %v493 = vpop.f32.mrf.mxu0
          %v494 = vadd.f32 %v421, %v493
          %495 = vmatmul.f32.gmra.mxu0 %v439
          %v496 = vpop.f32.mrf.mxu0
          %v497 = vadd.f32 %v426, %v496
          %498 = vdwg.mxu0
          %499 = vst [vmem:[#allocation2] sm:$0xff] %v459
          %500 = vst [vmem:[#allocation2 + $0x8] sm:$0xff] %v488
          %501 = vst [vmem:[#allocation2 + $0x10] sm:$0xff] %v462
          %502 = vst [vmem:[#allocation2 + $0x18] sm:$0xff] %v491
          %503 = vst [vmem:[#allocation2 + $0x20] sm:$0xff] %v465
          %504 = vst [vmem:[#allocation2 + $0x28] sm:$0xff] %v494
          %505 = vst [vmem:[#allocation2 + $0x30] sm:$0xff] %v468
          %506 = vst [vmem:[#allocation2 + $0x38] sm:$0xff] %v497
        $region64: #{tpu_custom_call.1} parent=47 // pred_fallthru
          _
        %v507 = vld [vmem:[%s328] sm:$0xff]
        %v508 = vld [vmem:[%s2] sm:$0xff]
        %v509 = vld [vmem:[%s2 + $0x8] sm:$0xff]
        %v510 = vld [vmem:[%s2 + $0x10] sm:$0xff]
        %v511 = vld [vmem:[%s2 + $0x18] sm:$0xff]
        %v512 = vld [vmem:[%s3] sm:$0x1]
        %v514 = vperm.slane %v512, 0
        %vm516 = vcmask 261120
        %v518 = vsel %vm516, %v507, 0
        %520 = vmatpush.msra.mxu0 0.0
        %521 = vmatpush.msra.mxu0 0.0
        %522 = vmatpush.msra.mxu0 0.0
        %523 = vmatpush.msra.mxu0 0.0
        %524 = vmatpush.msra.mxu0 0.0
        %525 = vmatpush.msra.mxu0 0.0
        %526 = vmatpush.msra.mxu0 0.0
        %527 = vmatpush.msra.mxu0 0.0
        %528 = vmatpush.msra.mxu0 0.0
        %529 = vmatpush.msra.mxu0 0.0
        %530 = vmatpush.msra.mxu0 0.0
        %531 = vmatpush.msra.mxu0 0.0
        %532 = vmatpush.msra.mxu0 %v511
        %533 = vmatpush.msra.mxu0 %v510
        %534 = vmatpush.msra.mxu0 %v509
        %535 = vmatpush.msra.mxu0 %v508
        %536 = vmatmul.f32.gmra.mxu0 %v518
        %v537 = vpop.f32.mrf.mxu0
        %v538 = vadd.f32 %v514, %v537
        %539 = vdwg.mxu0
        %v540 = vmul.f32 %v538, 0.35355338
        %v541 = vld [vmem:[%s387] sm:$0x3]
        %v542 = vld [vmem:[#allocation2] sm:$0xff]
        %v543 = vld [vmem:[#allocation2 + $0x8] sm:$0xff]
        %v545 = vperm.slane %v541, 0
        %v546 = vperm.slane %v541, 1
        %vm549 = vcmask 64512
        %v551 = vsel %vm549, %v540, 0
        %553 = vmatpush.msra.mxu0 0.0
        %554 = vmatpush.msra.mxu0 0.0
        %555 = vmatpush.msra.mxu0 0.0
        %556 = vmatpush.msra.mxu0 0.0
        %557 = vmatpush.msra.mxu0 0.0
        %558 = vmatpush.msra.mxu0 0.0
        %559 = vmatpush.msra.mxu0 0.0
        %560 = vmatpush.msra.mxu0 0.0
        %561 = vmatpush.msra.mxu0 0.0
        %562 = vmatpush.msra.mxu0 0.0
        %563 = vmatpush.msra.mxu0 0.0
        %564 = vmatpush.msra.mxu0 0.0
        %565 = vmatpush.msra.mxu0 0.0
        %566 = vmatpush.msra.mxu0 0.0
        %567 = vmatpush.msra.mxu0 0.0
        %568 = vmatpush.msra.mxu0 %v542
        %569 = vmatmul.f32.gmra.mxu0 %v551
        %v570 = vpop.f32.mrf.mxu0
        %v571 = vadd.f32 %v545, %v570
        %572 = vdwg.mxu0
        %573 = vmatpush.msra.mxu0 0.0
        %574 = vmatpush.msra.mxu0 0.0
        %575 = vmatpush.msra.mxu0 0.0
        %576 = vmatpush.msra.mxu0 0.0
        %577 = vmatpush.msra.mxu0 0.0
        %578 = vmatpush.msra.mxu0 0.0
        %579 = vmatpush.msra.mxu0 0.0
        %580 = vmatpush.msra.mxu0 0.0
        %581 = vmatpush.msra.mxu0 0.0
        %582 = vmatpush.msra.mxu0 0.0
        %583 = vmatpush.msra.mxu0 0.0
        %584 = vmatpush.msra.mxu0 0.0
        %585 = vmatpush.msra.mxu0 0.0
        %586 = vmatpush.msra.mxu0 0.0
        %587 = vmatpush.msra.mxu0 0.0
        %588 = vmatpush.msra.mxu0 %v543
        %589 = vmatmul.f32.gmra.mxu0 %v551
        %v590 = vpop.f32.mrf.mxu0
        %v591 = vadd.f32 %v546, %v590
        %592 = vdwg.mxu0
        %v593 = vld [vmem:[#allocation2 + $0x10] sm:$0xff]
        %v594 = vld [vmem:[#allocation2 + $0x18] sm:$0xff]
        %595 = vrot.lane.b32.xlu0 %v540, 120
        %v596 = vpop.permute.xlu0 %595
        %v597 = vsel %vm549, %v596, 0
        %599 = vmatpush.msra.mxu0 0.0
        %600 = vmatpush.msra.mxu0 0.0
        %601 = vmatpush.msra.mxu0 0.0
        %602 = vmatpush.msra.mxu0 0.0
        %603 = vmatpush.msra.mxu0 0.0
        %604 = vmatpush.msra.mxu0 0.0
        %605 = vmatpush.msra.mxu0 0.0
        %606 = vmatpush.msra.mxu0 0.0
        %607 = vmatpush.msra.mxu0 0.0
        %608 = vmatpush.msra.mxu0 0.0
        %609 = vmatpush.msra.mxu0 0.0
        %610 = vmatpush.msra.mxu0 0.0
        %611 = vmatpush.msra.mxu0 0.0
        %612 = vmatpush.msra.mxu0 0.0
        %613 = vmatpush.msra.mxu0 0.0
        %614 = vmatpush.msra.mxu0 %v593
        %615 = vmatmul.f32.gmra.mxu0 %v597
        %v616 = vpop.f32.mrf.mxu0
        %v617 = vadd.f32 %v545, %v616
        %618 = vdwg.mxu0
        %619 = vmatpush.msra.mxu0 0.0
        %620 = vmatpush.msra.mxu0 0.0
        %621 = vmatpush.msra.mxu0 0.0
        %622 = vmatpush.msra.mxu0 0.0
        %623 = vmatpush.msra.mxu0 0.0
        %624 = vmatpush.msra.mxu0 0.0
        %625 = vmatpush.msra.mxu0 0.0
        %626 = vmatpush.msra.mxu0 0.0
        %627 = vmatpush.msra.mxu0 0.0
        %628 = vmatpush.msra.mxu0 0.0
        %629 = vmatpush.msra.mxu0 0.0
        %630 = vmatpush.msra.mxu0 0.0
        %631 = vmatpush.msra.mxu0 0.0
        %632 = vmatpush.msra.mxu0 0.0
        %633 = vmatpush.msra.mxu0 0.0
        %634 = vmatpush.msra.mxu0 %v594
        %635 = vmatmul.f32.gmra.mxu0 %v597
        %v636 = vpop.f32.mrf.mxu0
        %v637 = vadd.f32 %v546, %v636
        %638 = vdwg.mxu0
        %v639 = vld [vmem:[#allocation2 + $0x20] sm:$0xff]
        %v640 = vld [vmem:[#allocation2 + $0x28] sm:$0xff]
        %641 = vrot.lane.b32.xlu0 %v540, 112
        %v642 = vpop.permute.xlu0 %641
        %v643 = vsel %vm549, %v642, 0
        %645 = vmatpush.msra.mxu0 0.0
        %646 = vmatpush.msra.mxu0 0.0
        %647 = vmatpush.msra.mxu0 0.0
        %648 = vmatpush.msra.mxu0 0.0
        %649 = vmatpush.msra.mxu0 0.0
        %650 = vmatpush.msra.mxu0 0.0
        %651 = vmatpush.msra.mxu0 0.0
        %652 = vmatpush.msra.mxu0 0.0
        %653 = vmatpush.msra.mxu0 0.0
        %654 = vmatpush.msra.mxu0 0.0
        %655 = vmatpush.msra.mxu0 0.0
        %656 = vmatpush.msra.mxu0 0.0
        %657 = vmatpush.msra.mxu0 0.0
        %658 = vmatpush.msra.mxu0 0.0
        %659 = vmatpush.msra.mxu0 0.0
        %660 = vmatpush.msra.mxu0 %v639
        %661 = vmatmul.f32.gmra.mxu0 %v643
        %v662 = vpop.f32.mrf.mxu0
        %v663 = vadd.f32 %v545, %v662
        %664 = vdwg.mxu0
        %665 = vmatpush.msra.mxu0 0.0
        %666 = vmatpush.msra.mxu0 0.0
        %667 = vmatpush.msra.mxu0 0.0
        %668 = vmatpush.msra.mxu0 0.0
        %669 = vmatpush.msra.mxu0 0.0
        %670 = vmatpush.msra.mxu0 0.0
        %671 = vmatpush.msra.mxu0 0.0
        %672 = vmatpush.msra.mxu0 0.0
        %673 = vmatpush.msra.mxu0 0.0
        %674 = vmatpush.msra.mxu0 0.0
        %675 = vmatpush.msra.mxu0 0.0
        %676 = vmatpush.msra.mxu0 0.0
        %677 = vmatpush.msra.mxu0 0.0
        %678 = vmatpush.msra.mxu0 0.0
        %679 = vmatpush.msra.mxu0 0.0
        %680 = vmatpush.msra.mxu0 %v640
        %681 = vmatmul.f32.gmra.mxu0 %v643
        %v682 = vpop.f32.mrf.mxu0
        %v683 = vadd.f32 %v546, %v682
        %684 = vdwg.mxu0
        %v685 = vld [vmem:[#allocation2 + $0x30] sm:$0xff]
        %v686 = vld [vmem:[#allocation2 + $0x38] sm:$0xff]
        %687 = vrot.lane.b32.xlu0 %v540, 104
        %v688 = vpop.permute.xlu0 %687
        %v689 = vsel %vm549, %v688, 0
        %691 = vmatpush.msra.mxu0 0.0
        %692 = vmatpush.msra.mxu0 0.0
        %693 = vmatpush.msra.mxu0 0.0
        %694 = vmatpush.msra.mxu0 0.0
        %695 = vmatpush.msra.mxu0 0.0
        %696 = vmatpush.msra.mxu0 0.0
        %697 = vmatpush.msra.mxu0 0.0
        %698 = vmatpush.msra.mxu0 0.0
        %699 = vmatpush.msra.mxu0 0.0
        %700 = vmatpush.msra.mxu0 0.0
        %701 = vmatpush.msra.mxu0 0.0
        %702 = vmatpush.msra.mxu0 0.0
        %703 = vmatpush.msra.mxu0 0.0
        %704 = vmatpush.msra.mxu0 0.0
        %705 = vmatpush.msra.mxu0 0.0
        %706 = vmatpush.msra.mxu0 %v685
        %707 = vmatmul.f32.gmra.mxu0 %v689
        %v708 = vpop.f32.mrf.mxu0
        %v709 = vadd.f32 %v545, %v708
        %710 = vdwg.mxu0
        %711 = vmatpush.msra.mxu0 0.0
        %712 = vmatpush.msra.mxu0 0.0
        %713 = vmatpush.msra.mxu0 0.0
        %714 = vmatpush.msra.mxu0 0.0
        %715 = vmatpush.msra.mxu0 0.0
        %716 = vmatpush.msra.mxu0 0.0
        %717 = vmatpush.msra.mxu0 0.0
        %718 = vmatpush.msra.mxu0 0.0
        %719 = vmatpush.msra.mxu0 0.0
        %720 = vmatpush.msra.mxu0 0.0
        %721 = vmatpush.msra.mxu0 0.0
        %722 = vmatpush.msra.mxu0 0.0
        %723 = vmatpush.msra.mxu0 0.0
        %724 = vmatpush.msra.mxu0 0.0
        %725 = vmatpush.msra.mxu0 0.0
        %726 = vmatpush.msra.mxu0 %v686
        %727 = vmatmul.f32.gmra.mxu0 %v689
        %v728 = vpop.f32.mrf.mxu0
        %v729 = vadd.f32 %v546, %v728
        %730 = vdwg.mxu0
        %v731 = vmax.f32 %v571, %v663
        %v732 = vmax.f32 %v591, %v683
        %v733 = vmax.f32 %v617, %v709
        %v734 = vmax.f32 %v637, %v729
        %v735 = vmax.f32 %v731, %v732
        %v736 = vmax.f32 %v733, %v734
        %v737 = vmax.f32 %v735, %v736
        %738 = vmax.xlane.f32.xlu0 %v737
        %v739 = vpop.xlane.xlu0 %738
        %v740 = vsub.f32 %v571, %v739
        %v741 = vsub.f32 %v591, %v739
        %v742 = vsub.f32 %v617, %v739
        %v743 = vsub.f32 %v637, %v739
        %v744 = vsub.f32 %v663, %v739
        %v745 = vsub.f32 %v683, %v739
        %v746 = vsub.f32 %v709, %v739
        %v747 = vsub.f32 %v729, %v739
        %v748 = vmul.f32 %v740, 1.442695
        %v749 = vpow.pop %v748
        %v750 = vmul.f32 %v741, 1.442695
        %v751 = vpow.pop %v750
        %v752 = vmul.f32 %v742, 1.442695
        %v753 = vpow.pop %v752
        %v754 = vmul.f32 %v743, 1.442695
        %v755 = vpow.pop %v754
        %v756 = vmul.f32 %v744, 1.442695
        %v757 = vpow.pop %v756
        %v758 = vmul.f32 %v745, 1.442695
        %v759 = vpow.pop %v758
        %v760 = vmul.f32 %v746, 1.442695
        %v761 = vpow.pop %v760
        %v762 = vmul.f32 %v747, 1.442695
        %v763 = vpow.pop %v762
        %v764 = vadd.f32 %v749, %v751
        %v765 = vadd.f32 %v764, %v753
        %v766 = vadd.f32 %v765, %v755
        %v767 = vadd.f32 %v766, %v757
        %v768 = vadd.f32 %v767, %v759
        %v769 = vadd.f32 %v768, %v761
        %v770 = vadd.f32 %v769, %v763
        %771 = vadd.xlane.f32.xlu0 %v770
        %v772 = vpop.xlane.xlu0 %771
        %v773 = vrcp.pop %v772
        %v774 = vmul.f32 %v772, %v773
        %v775 = vsub.f32 1.0, %v774
        %v776 = vmul.f32 %v773, %v775
        %v777 = vadd.f32 %v773, %v776
        %vm778 = vweird.f32 %v772
        %vm779 = vweird.f32 %v773
        %vm780 = vmor %vm778, %vm779
        %v781 = vsel %vm780, %v773, %v777
        %v782 = vand.u32 2147483647, %v772
        %vm783 = vcmp.eq.f32.partialorder %v782, 8.507059e+37
        %v784 = vand.u32 %v772, 2147483648
        %v785 = vor.u32 1.1754944e-38, %v784
        %v786 = vsel %vm783, %v785, %v781
        %v787 = vmul.f32 %v749, %v786
        %v788 = vmul.f32 %v751, %v786
        %v789 = vmul.f32 %v753, %v786
        %v790 = vmul.f32 %v755, %v786
        %v791 = vmul.f32 %v757, %v786
        %v792 = vmul.f32 %v759, %v786
        %v793 = vmul.f32 %v761, %v786
        %v794 = vmul.f32 %v763, %v786
        %795 = vst [vmem:[%s383] sm:$0xff] %v787
        %796 = vst [vmem:[%s383 + $0x8] sm:$0xff] %v788
        %797 = vst [vmem:[%s383 + $0x10] sm:$0xff] %v789
        %798 = vst [vmem:[%s383 + $0x18] sm:$0xff] %v790
        %799 = vst [vmem:[%s383 + $0x20] sm:$0xff] %v791
        %800 = vst [vmem:[%s383 + $0x28] sm:$0xff] %v792
        %801 = vst [vmem:[%s383 + $0x30] sm:$0xff] %v793
        %802 = vst [vmem:[%s383 + $0x38] sm:$0xff] %v794
        %s803 = sand.u32 %s213, 1
        %s804 = scalar_lea.sflag [#allocation5], %s803
        %s805 = sand.u32 %s213, 1
        %s806 = smul.addr %s805, 64
        %s807 = scalar_lea.vmem [#allocation9], %s806
        // Predicated region
        $region65: #{tpu_custom_call.1} parent=47 // pred_check
          %p808 = pneg %p223
        $region66: #{tpu_custom_call.1} parent=47 // pred_check_branch
          %810 = sbr.rel (%p808) target = $region68
        $region67: #{tpu_custom_call.1} parent=47 // pred_region
          %812 = vsyncadd %s804, 0
          %s813 = smul.addr %s32, 8
          %s814 = smul.addr %s31, 8
          %s815 = sadd.s32 %s813, %s814
          %s816 = smul.addr %s815, 8
          %s817 = scalar_lea.hbm %s7, %s816
          %s819 = sshll.u32 %s807, 4
          %s820 = int_to_ptr.vmem [resolvable:$true] %s819
          %s821 = sshll.u32 %s817, 4
          %s822 = int_to_ptr.hbm [resolvable:$true] %s821
          %824 = dma.vmem_to_hbm [thread:$0]  %s820, 1024, %s822, %s804
        $region68: #{tpu_custom_call.1} parent=47 // pred_fallthru
          _
      $region48: #{tpu_custom_call.1} parent=5 // pred_fallthru
        _
      %p825 = scmp.le.s32.totalorder 2, %s22
      // Predicated region
      $region69: #{tpu_custom_call.1} parent=5 // pred_check
        %p826 = pneg %p825
      $region70: #{tpu_custom_call.1} parent=5 // pred_check_branch
        %828 = sbr.rel (%p826) target = $region72
      $region71: #{tpu_custom_call.1} parent=5 // pred_region
        %s829 = ssub.s32 %s22, 2
        // Predicated region
        $region73: #{tpu_custom_call.1} parent=71 // pred_check
          %p830 = pneg %p229
        $region74: #{tpu_custom_call.1} parent=71 // pred_check_branch
          %832 = sbr.rel (%p830) target = $region76
        $region75: #{tpu_custom_call.1} parent=71 // pred_region
          %s833 = sand.u32 %s214, 1
          %s834 = scalar_lea.sflag [#allocation5], %s833
          %s835 = sand.u32 %s214, 1
          %s836 = smul.addr %s835, 64
          %s837 = scalar_lea.vmem [#allocation9], %s836
          %839 = dma.done %s834, 1024
        $region76: #{tpu_custom_call.1} parent=71 // pred_fallthru
          _
      $region72: #{tpu_custom_call.1} parent=5 // pred_fallthru
        _
    $region6: #{tpu_custom_call.1} parent=1 // loop_footer
      %s26 = sadd.s32 1, %s22
    $region7: #{tpu_custom_call.1} parent=1 // loop_footer_branch
      %21 = sbr.rel target = $region3
    $region8: #{tpu_custom_call.1} parent=1 // loop_exit
      _
    %840 = vsyncpa [#allocation4], 1
    %s841 = scalar_lea.sflag [#allocation4], 1
    %842 = vsyncpa %s841, 1
    %843 = vsyncpa [#allocation7], 1
    %s844 = scalar_lea.sflag [#allocation7], 1
    %845 = vsyncpa %s844, 1
    %846 = vsyncpa [#allocation5], 1
    %s847 = scalar_lea.sflag [#allocation5], 1
    %848 = vsyncpa %s847, 1

</llo_original>
